<compile_context>
chip_gen: v6e
topology: v6e:2x2x1
jax: 0.10.0
libtpu: 0.0.40
codegen_flags: <defaults>
</compile_context>

<pallas_src>
import functools

import jax
import jax.numpy as jnp
from jax import lax
from jax.experimental import pallas as pl
from jax.experimental.pallas import tpu as pltpu

_N_STATS = 7
_LN2 = 0.6931471805599453


def _round_up(x, m):
    return ((x + m - 1) // m) * m


def _default_tile_p(P, C):
    # Budget ~6 MiB of in-flight f32 (C, TP) temporaries per spatial tile:
    # conservative for v5e scoped VMEM and v7x's 64 MiB physical VMEM, and
    # large enough to amortize the per-grid-step pipeline overhead on v6e.
    budget = 6 * 1024 * 1024
    tp = budget // (14 * 4 * max(int(C), 1))
    tp = min(tp, 8192, _round_up(P, 128))
    tp = max(128, (tp // 128) * 128)
    return int(tp)


def _loss_stats_kernel(pred_ref, tgt_ref, out_ref, acc_ref, *, p_valid, mask_tail):
    # pred_ref: (1, C, TP) logits tile of one batch element
    # tgt_ref : (1, 1, TP) int class ids (spatial padding uses id == C)
    # out_ref : (1, N_STATS, 1, C) per-batch statistics (written on last tile)
    # acc_ref : (N_STATS, 1, C) f32 accumulator, resident across spatial tiles
    p = pl.program_id(1)

    @pl.when(p == 0)
    def _init():
        acc_ref[...] = jnp.zeros_like(acc_ref)

    pred = pred_ref[...].astype(jnp.float32)                 # (1, C, TP)
    tgt = tgt_ref[...].astype(jnp.int32)                     # (1, 1, TP)
    _, C, TP = pred.shape

    cls_ids = lax.broadcasted_iota(jnp.int32, (1, C, TP), 1)
    onehot = (tgt == cls_ids).astype(jnp.float32)            # (1, C, TP)

    # ---- softmax / log-softmax over the class axis ----
    m = jnp.max(pred, axis=1, keepdims=True)                 # (1, 1, TP)
    z = pred - m
    ez = jnp.exp(z)
    se = jnp.sum(ez, axis=1, keepdims=True)                  # (1, 1, TP)
    probas = ez * pl.reciprocal(se, approx=True)             # softmax (EUP recip)
    logsm = z - jnp.log(se)                                  # log-softmax

    # ---- lc-Dice pieces: sigmoid via one tanh, stable/cheap log-cosh ----
    sig = 0.5 * (jnp.tanh(0.5 * pred) + 1.0)                 # sigmoid(pred)
    ad = jnp.abs(sig - onehot)
    # log(cosh(x)) = |x| + log(1 + exp(-2|x|)) - log(2)
    logcosh = ad + jnp.log(1.0 + jnp.exp(-2.0 * ad)) - _LN2

    if mask_tail:
        # Zero contributions of the padded spatial tail.  The padded target id
        # (== C) already makes `onehot` zero there, so only the non-one-hot
        # sums need explicit masking.
        lane = lax.broadcasted_iota(jnp.int32, (1, 1, TP), 2)
        valid = ((p * TP + lane) < p_valid).astype(jnp.float32)
        probas_s = probas * valid
        sig_s = sig * valid
        logcosh_s = logcosh * valid
    else:
        probas_s = probas
        sig_s = sig
        logcosh_s = logcosh

    # ---- per-(b, c) partial sums over this spatial tile ----
    acc_ref[0] += jnp.sum(onehot, axis=2)                    # class pixel counts
    acc_ref[1] += jnp.sum(onehot * (-logsm), axis=2)         # CE sum per class
    acc_ref[2] += jnp.sum(probas * onehot, axis=2)           # tversky intersection
    acc_ref[3] += jnp.sum(probas_s, axis=2)                  # sum softmax probs (fps = this - inter)
    acc_ref[4] += jnp.sum(sig * onehot, axis=2)              # dice intersection
    acc_ref[5] += jnp.sum(sig_s, axis=2)                     # sum sigmoid probs
    acc_ref[6] += jnp.sum(logcosh_s, axis=2)                 # log-cosh sum

    @pl.when(p == pl.num_programs(1) - 1)
    def _finalize():
        out_ref[0] = acc_ref[...]


def _compute_stats(pred3, tgt3, p_valid, tile_p):
    B, C, P_pad = pred3.shape
    n_p = P_pad // tile_p
    kernel = functools.partial(
        _loss_stats_kernel, p_valid=p_valid, mask_tail=(P_pad != p_valid))
    return pl.pallas_call(
        kernel,
        out_shape=jax.ShapeDtypeStruct((B, _N_STATS, 1, C), jnp.float32),
        grid_spec=pltpu.PrefetchScalarGridSpec(
            num_scalar_prefetch=0,
            grid=(B, n_p),
            in_specs=[
                pl.BlockSpec((1, C, tile_p), lambda b, p: (b, 0, p)),
                pl.BlockSpec((1, 1, tile_p), lambda b, p: (b, 0, p)),
            ],
            out_specs=pl.BlockSpec((1, _N_STATS, 1, C), lambda b, p: (b, 0, 0, 0)),
            scratch_shapes=[pltpu.VMEM((_N_STATS, 1, C), jnp.float32)],
        ),
        compiler_params=pltpu.CompilerParams(
            dimension_semantics=("parallel", "arbitrary"),
            vmem_limit_bytes=32 * 1024 * 1024,
        ),
    )(pred3, tgt3)


def bce_sac_lcdice_loss(pred, target, *, num_classes, alpha, beta, phi,
                        cel, ftl, lcl, K=3, eps=1e-7, tile_p=None):
    """Forward pass of BCE_SAC_lcDice (GapMat weight map == identity, see TODO)."""
    B, C, H, W = pred.shape
    assert C == num_classes
    P = H * W

    pred3 = pred.reshape(B, C, P)
    if pred3.dtype != jnp.bfloat16:          # keep bf16 inputs bf16 (less HBM traffic)
        pred3 = pred3.astype(jnp.float32)
    tgt3 = target.reshape(B, 1, P)

    if tile_p is None:
        tile_p = _default_tile_p(P, C)
    tile_p = max(128, (min(int(tile_p), _round_up(P, 128)) // 128) * 128)
    P_pad = _round_up(P, tile_p)
    if P_pad != P:
        pad = P_pad - P
        pred3 = jnp.pad(pred3, ((0, 0), (0, 0), (0, pad)))
        # pad target with an id that matches no class -> one-hot is zero there
        tgt3 = jnp.pad(tgt3, ((0, 0), (0, 0), (0, pad)),
                       constant_values=num_classes)
    tgt_dtype = jnp.int8 if num_classes < 127 else jnp.int32
    tgt3 = tgt3.astype(tgt_dtype)

    stats = _compute_stats(pred3, tgt3, P, tile_p)[:, :, 0, :]    # (B, 7, C)

    count_bc = stats[:, 0, :]
    ce_bc = stats[:, 1, :]
    inter_bc = stats[:, 2, :]
    sprob_bc = stats[:, 3, :]
    dice_inter_b = stats[:, 4, :].sum(axis=1)                     # (B,)
    sum_sig_b = stats[:, 5, :].sum(axis=1)                        # (B,)
    logcosh_sum = stats[:, 6, :].sum()

    # ---- weighted cross-entropy (weights = 1 - class frequency) ----
    count_c = count_bc.sum(axis=0)                                # (C,)
    w = 1.0 - count_c / count_c.sum()                             # self.weights(...)
    ce_sum_c = ce_bc.sum(axis=0)
    # torch CrossEntropyLoss(weight=w, reduction='mean') semantics:
    ce_seg = (w * ce_sum_c).sum() / (w * count_c).sum()

    # ---- Tversky (focal) term: (1 - mean_c tversky_score)^phi ----
    inter_c = inter_bc.sum(axis=0)
    fps_c = sprob_bc.sum(axis=0) - inter_c
    fns_c = count_c - inter_c
    tv_score = (inter_c / (inter_c + alpha * fps_c + beta * fns_c + eps)).mean()
    tv = (1.0 - tv_score) ** phi

    # ---- log-cosh Dice term (lc_dice_loss defaults alpha=beta=1.0) ----
    sum_onehot_b = count_bc.sum(axis=1)                           # (B,)
    dice_loss = (1.0 - (2.0 * dice_inter_b + 1.0)
                 / (sum_sig_b + sum_onehot_b + 1.0)).mean()
    logcosh_mean = logcosh_sum / (B * C * H * W)
    lcd = 1.0 * logcosh_mean + 1.0 * dice_loss

    return cel * ce_seg + ftl * tv + lcl * lcd


# ---------------- pure-JAX reference (for correctness check) ----------------
def _reference_loss(pred, target, *, num_classes, alpha, beta, phi,
                    cel, ftl, lcl, eps=1e-7):
    B, C, H, W = pred.shape
    tgt = target.reshape(B, H, W).astype(jnp.int32)
    onehot = jax.nn.one_hot(tgt, C, dtype=jnp.float32)            # (B,H,W,C)
    onehot = jnp.transpose(onehot, (0, 3, 1, 2))                  # (B,C,H,W)

    logsm = jax.nn.log_softmax(pred, axis=1)
    probas = jax.nn.softmax(pred, axis=1)
    ce_pix = -jnp.sum(onehot * logsm, axis=1)                     # (B,H,W)

    count_c = jnp.sum(onehot, axis=(0, 2, 3))
    w = 1.0 - count_c / count_c.sum()
    w_pix = w[tgt]
    ce_seg = jnp.sum(w_pix * ce_pix) / jnp.sum(w_pix)

    inter_c = jnp.sum(probas * onehot, axis=(0, 2, 3))
    fps_c = jnp.sum(probas * (1 - onehot), axis=(0, 2, 3))
    fns_c = jnp.sum((1 - probas) * onehot, axis=(0, 2, 3))
    tv_score = (inter_c / (inter_c + alpha * fps_c + beta * fns_c + eps)).mean()
    tv = (1.0 - tv_score) ** phi

    sig = jax.nn.sigmoid(pred)
    logcosh_mean = jnp.mean(jnp.log(jnp.cosh(sig - onehot)))
    s_in = sig.reshape(B, -1)
    s_tg = onehot.reshape(B, -1)
    inter_b = jnp.sum(s_in * s_tg, axis=1)
    dice_loss = jnp.mean(1.0 - (2.0 * inter_b + 1.0)
                         / (s_in.sum(axis=1) + s_tg.sum(axis=1) + 1.0))
    lcd = logcosh_mean + dice_loss

    return cel * ce_seg + ftl * tv + lcl * lcd


if __name__ == "__main__":
    key = jax.random.PRNGKey(0)
    kp, kt = jax.random.split(key)

    hp = dict(num_classes=4, alpha=0.7, beta=0.3, phi=1.5,
              cel=1.0, ftl=0.5, lcl=0.5)

    # Case 1: spatial size divisible by the tile (exercises multi-tile accumulation).
    B, C, H, W = 2, 4, 16, 16
    pred = jax.random.normal(kp, (B, C, H, W), dtype=jnp.float32)
    target = jax.random.randint(kt, (B, 1, H, W), 0, C, dtype=jnp.int32)
    loss = jax.block_until_ready(
        bce_sac_lcdice_loss(pred, target, **hp, K=3, tile_p=128))
    ref = _reference_loss(pred, target, **hp)
    assert jnp.isfinite(loss), "kernel produced non-finite loss"
    assert abs(float(loss) - float(ref)) < 5e-3, (float(loss), float(ref))

    # Case 2: ragged spatial size (exercises the padded-tail masking path).
    H2 = W2 = 13
    pred2 = jax.random.normal(kp, (B, C, H2, W2), dtype=jnp.float32)
    target2 = jax.random.randint(kt, (B, 1, H2, W2), 0, C, dtype=jnp.int32)
    loss2 = jax.block_until_ready(
        bce_sac_lcdice_loss(pred2, target2, **hp, K=3, tile_p=128))
    ref2 = _reference_loss(pred2, target2, **hp)
    assert jnp.isfinite(loss2), "kernel produced non-finite loss (ragged case)"
    assert abs(float(loss2) - float(ref2)) < 5e-3, (float(loss2), float(ref2))

    print("KERNEL_OK")
</pallas_src>

<mosaic_0001>
module attributes {stable_mosaic.version = 11 : i64} {
  func.func @_loss_stats_kernel(%arg0: i32, %arg1: i32, %arg2: memref<1x4x128xf32, #tpu.memory_space<vmem>>, %arg3: memref<1x1x128xi8, #tpu.memory_space<vmem>>, %arg4: memref<1x7x1x4xf32, #tpu.memory_space<vmem>>, %arg5: memref<7x1x4xf32, #tpu.memory_space<vmem>>) attributes {dimension_semantics = [#tpu.dimension_semantics<parallel>, #tpu.dimension_semantics<arbitrary>], iteration_bounds = array<i64: 2, 2>, scalar_prefetch = 0 : i64, scratch_operands = 1 : i64, tpu.core_type = #tpu.core_type<tc>, window_params = [{transform_indices = @transform_0, window_bounds = array<i64: 1, 4, 128>}, {transform_indices = @transform_1, window_bounds = array<i64: 1, 1, 128>}, {transform_indices = @transform_2, window_bounds = array<i64: 1, 7, 1, 4>}]} {
    %c0_i32 = arith.constant 0 : i32
    %0 = arith.cmpi eq, %arg1, %c0_i32 : i32
    %1 = arith.extui %0 : i1 to i32
    %c0_i32_0 = arith.constant 0 : i32
    %2 = arith.cmpi ne, %1, %c0_i32_0 : i32
    scf.if %2 {
      %cst_58 = arith.constant 0.000000e+00 : f32
      %99 = vector.broadcast %cst_58 : f32 to vector<7x1x4xf32>
      %c0_59 = arith.constant 0 : index
      %c0_60 = arith.constant 0 : index
      %c0_61 = arith.constant 0 : index
      %100 = vector.load %arg5[%c0_59, %c0_60, %c0_61] : memref<7x1x4xf32, #tpu.memory_space<vmem>>, vector<7x1x4xf32>
      tpu.vector_store %arg5[%c0_59, %c0_60, %c0_61], %99 {strides = array<i32>} : memref<7x1x4xf32, #tpu.memory_space<vmem>>, vector<7x1x4xf32>,
    } else {
    }
    %c0 = arith.constant 0 : index
    %c0_1 = arith.constant 0 : index
    %c0_2 = arith.constant 0 : index
    %3 = vector.load %arg2[%c0, %c0_1, %c0_2] : memref<1x4x128xf32, #tpu.memory_space<vmem>>, vector<1x4x128xf32>
    %c0_3 = arith.constant 0 : index
    %c0_4 = arith.constant 0 : index
    %c0_5 = arith.constant 0 : index
    %4 = vector.load %arg3[%c0_3, %c0_4, %c0_5] : memref<1x1x128xi8, #tpu.memory_space<vmem>>, vector<1x1x128xi8>
    %5 = arith.extsi %4 : vector<1x1x128xi8> to vector<1x1x128xi32>
    %6 = tpu.iota {dimensions = array<i32: 1>} : vector<1x4x128xi32>
    %7 = vector.broadcast %5 : vector<1x1x128xi32> to vector<1x4x128xi32>
    %8 = arith.cmpi eq, %7, %6 : vector<1x4x128xi32>
    %9 = arith.extui %8 : vector<1x4x128xi1> to vector<1x4x128xi32>
    %10 = arith.sitofp %9 : vector<1x4x128xi32> to vector<1x4x128xf32>
    %cst = arith.constant dense<0xFF800000> : vector<1x128xf32>
    %11 = vector.multi_reduction <maximumf>, %3, %cst [1] : vector<1x4x128xf32> to vector<1x128xf32>
    %12 = vector.shape_cast %11 : vector<1x128xf32> to vector<1x1x128xf32>
    %13 = vector.broadcast %12 : vector<1x1x128xf32> to vector<1x4x128xf32>
    %14 = arith.subf %3, %13 : vector<1x4x128xf32>
    %15 = math.exp %14 : vector<1x4x128xf32>
    %cst_6 = arith.constant dense<0.000000e+00> : vector<1x128xf32>
    %16 = vector.multi_reduction <add>, %15, %cst_6 [1] : vector<1x4x128xf32> to vector<1x128xf32>
    %17 = vector.shape_cast %16 : vector<1x128xf32> to vector<1x1x128xf32>
    %18 = tpu.reciprocal %17 {approx = true} : vector<1x1x128xf32> -> vector<1x1x128xf32>
    %19 = vector.broadcast %18 : vector<1x1x128xf32> to vector<1x4x128xf32>
    %20 = arith.mulf %15, %19 : vector<1x4x128xf32>
    %21 = math.log %17 : vector<1x1x128xf32>
    %22 = vector.broadcast %21 : vector<1x1x128xf32> to vector<1x4x128xf32>
    %23 = arith.subf %14, %22 : vector<1x4x128xf32>
    %cst_7 = arith.constant 5.000000e-01 : f32
    %24 = vector.broadcast %cst_7 : f32 to vector<1x4x128xf32>
    %25 = arith.mulf %24, %3 : vector<1x4x128xf32>
    %26 = math.tanh %25 : vector<1x4x128xf32>
    %cst_8 = arith.constant 1.000000e+00 : f32
    %27 = vector.broadcast %cst_8 : f32 to vector<1x4x128xf32>
    %28 = arith.addf %26, %27 : vector<1x4x128xf32>
    %cst_9 = arith.constant 5.000000e-01 : f32
    %29 = vector.broadcast %cst_9 : f32 to vector<1x4x128xf32>
    %30 = arith.mulf %29, %28 : vector<1x4x128xf32>
    %31 = arith.subf %30, %10 : vector<1x4x128xf32>
    %32 = math.absf %31 : vector<1x4x128xf32>
    %cst_10 = arith.constant -2.000000e+00 : f32
    %33 = vector.broadcast %cst_10 : f32 to vector<1x4x128xf32>
    %34 = arith.mulf %33, %32 : vector<1x4x128xf32>
    %35 = math.exp %34 : vector<1x4x128xf32>
    %cst_11 = arith.constant 1.000000e+00 : f32
    %36 = vector.broadcast %cst_11 : f32 to vector<1x4x128xf32>
    %37 = arith.addf %36, %35 : vector<1x4x128xf32>
    %38 = math.log %37 : vector<1x4x128xf32>
    %39 = arith.addf %32, %38 : vector<1x4x128xf32>
    %cst_12 = arith.constant 0.693147182 : f32
    %40 = vector.broadcast %cst_12 : f32 to vector<1x4x128xf32>
    %41 = arith.subf %39, %40 : vector<1x4x128xf32>
    %c0_13 = arith.constant 0 : index
    %c0_14 = arith.constant 0 : index
    %c0_15 = arith.constant 0 : index
    %42 = vector.load %arg5[%c0_13, %c0_14, %c0_15] : memref<7x1x4xf32, #tpu.memory_space<vmem>>, vector<1x1x4xf32>
    %43 = vector.shape_cast %42 : vector<1x1x4xf32> to vector<1x4xf32>
    %cst_16 = arith.constant dense<0.000000e+00> : vector<1x4xf32>
    %44 = vector.multi_reduction <add>, %10, %cst_16 [2] : vector<1x4x128xf32> to vector<1x4xf32>
    %45 = arith.addf %43, %44 : vector<1x4xf32>
    %c0_17 = arith.constant 0 : index
    %c0_18 = arith.constant 0 : index
    %c0_19 = arith.constant 0 : index
    %46 = vector.load %arg5[%c0_17, %c0_18, %c0_19] : memref<7x1x4xf32, #tpu.memory_space<vmem>>, vector<1x1x4xf32>
    %47 = vector.shape_cast %46 : vector<1x1x4xf32> to vector<1x4xf32>
    %48 = vector.shape_cast %45 : vector<1x4xf32> to vector<1x1x4xf32>
    tpu.vector_store %arg5[%c0_17, %c0_18, %c0_19], %48 {strides = array<i32>} : memref<7x1x4xf32, #tpu.memory_space<vmem>>, vector<1x1x4xf32>,
    %c1 = arith.constant 1 : index
    %c0_20 = arith.constant 0 : index
    %c0_21 = arith.constant 0 : index
    %49 = vector.load %arg5[%c1, %c0_20, %c0_21] : memref<7x1x4xf32, #tpu.memory_space<vmem>>, vector<1x1x4xf32>
    %50 = vector.shape_cast %49 : vector<1x1x4xf32> to vector<1x4xf32>
    %cst_22 = arith.constant 0.000000e+00 : f32
    %51 = vector.broadcast %cst_22 : f32 to vector<1x4x128xf32>
    %52 = arith.subf %51, %23 : vector<1x4x128xf32>
    %53 = arith.mulf %10, %52 : vector<1x4x128xf32>
    %cst_23 = arith.constant dense<0.000000e+00> : vector<1x4xf32>
    %54 = vector.multi_reduction <add>, %53, %cst_23 [2] : vector<1x4x128xf32> to vector<1x4xf32>
    %55 = arith.addf %50, %54 : vector<1x4xf32>
    %c1_24 = arith.constant 1 : index
    %c0_25 = arith.constant 0 : index
    %c0_26 = arith.constant 0 : index
    %56 = vector.load %arg5[%c1_24, %c0_25, %c0_26] : memref<7x1x4xf32, #tpu.memory_space<vmem>>, vector<1x1x4xf32>
    %57 = vector.shape_cast %56 : vector<1x1x4xf32> to vector<1x4xf32>
    %58 = vector.shape_cast %55 : vector<1x4xf32> to vector<1x1x4xf32>
    tpu.vector_store %arg5[%c1_24, %c0_25, %c0_26], %58 {strides = array<i32>} : memref<7x1x4xf32, #tpu.memory_space<vmem>>, vector<1x1x4xf32>,
    %c2 = arith.constant 2 : index
    %c0_27 = arith.constant 0 : index
    %c0_28 = arith.constant 0 : index
    %59 = vector.load %arg5[%c2, %c0_27, %c0_28] : memref<7x1x4xf32, #tpu.memory_space<vmem>>, vector<1x1x4xf32>
    %60 = vector.shape_cast %59 : vector<1x1x4xf32> to vector<1x4xf32>
    %61 = arith.mulf %20, %10 : vector<1x4x128xf32>
    %cst_29 = arith.constant dense<0.000000e+00> : vector<1x4xf32>
    %62 = vector.multi_reduction <add>, %61, %cst_29 [2] : vector<1x4x128xf32> to vector<1x4xf32>
    %63 = arith.addf %60, %62 : vector<1x4xf32>
    %c2_30 = arith.constant 2 : index
    %c0_31 = arith.constant 0 : index
    %c0_32 = arith.constant 0 : index
    %64 = vector.load %arg5[%c2_30, %c0_31, %c0_32] : memref<7x1x4xf32, #tpu.memory_space<vmem>>, vector<1x1x4xf32>
    %65 = vector.shape_cast %64 : vector<1x1x4xf32> to vector<1x4xf32>
    %66 = vector.shape_cast %63 : vector<1x4xf32> to vector<1x1x4xf32>
    tpu.vector_store %arg5[%c2_30, %c0_31, %c0_32], %66 {strides = array<i32>} : memref<7x1x4xf32, #tpu.memory_space<vmem>>, vector<1x1x4xf32>,
    %c3 = arith.constant 3 : index
    %c0_33 = arith.constant 0 : index
    %c0_34 = arith.constant 0 : index
    %67 = vector.load %arg5[%c3, %c0_33, %c0_34] : memref<7x1x4xf32, #tpu.memory_space<vmem>>, vector<1x1x4xf32>
    %68 = vector.shape_cast %67 : vector<1x1x4xf32> to vector<1x4xf32>
    %cst_35 = arith.constant dense<0.000000e+00> : vector<1x4xf32>
    %69 = vector.multi_reduction <add>, %20, %cst_35 [2] : vector<1x4x128xf32> to vector<1x4xf32>
    %70 = arith.addf %68, %69 : vector<1x4xf32>
    %c3_36 = arith.constant 3 : index
    %c0_37 = arith.constant 0 : index
    %c0_38 = arith.constant 0 : index
    %71 = vector.load %arg5[%c3_36, %c0_37, %c0_38] : memref<7x1x4xf32, #tpu.memory_space<vmem>>, vector<1x1x4xf32>
    %72 = vector.shape_cast %71 : vector<1x1x4xf32> to vector<1x4xf32>
    %73 = vector.shape_cast %70 : vector<1x4xf32> to vector<1x1x4xf32>
    tpu.vector_store %arg5[%c3_36, %c0_37, %c0_38], %73 {strides = array<i32>} : memref<7x1x4xf32, #tpu.memory_space<vmem>>, vector<1x1x4xf32>,
    %c4 = arith.constant 4 : index
    %c0_39 = arith.constant 0 : index
    %c0_40 = arith.constant 0 : index
    %74 = vector.load %arg5[%c4, %c0_39, %c0_40] : memref<7x1x4xf32, #tpu.memory_space<vmem>>, vector<1x1x4xf32>
    %75 = vector.shape_cast %74 : vector<1x1x4xf32> to vector<1x4xf32>
    %76 = arith.mulf %30, %10 : vector<1x4x128xf32>
    %cst_41 = arith.constant dense<0.000000e+00> : vector<1x4xf32>
    %77 = vector.multi_reduction <add>, %76, %cst_41 [2] : vector<1x4x128xf32> to vector<1x4xf32>
    %78 = arith.addf %75, %77 : vector<1x4xf32>
    %c4_42 = arith.constant 4 : index
    %c0_43 = arith.constant 0 : index
    %c0_44 = arith.constant 0 : index
    %79 = vector.load %arg5[%c4_42, %c0_43, %c0_44] : memref<7x1x4xf32, #tpu.memory_space<vmem>>, vector<1x1x4xf32>
    %80 = vector.shape_cast %79 : vector<1x1x4xf32> to vector<1x4xf32>
    %81 = vector.shape_cast %78 : vector<1x4xf32> to vector<1x1x4xf32>
    tpu.vector_store %arg5[%c4_42, %c0_43, %c0_44], %81 {strides = array<i32>} : memref<7x1x4xf32, #tpu.memory_space<vmem>>, vector<1x1x4xf32>,
    %c5 = arith.constant 5 : index
    %c0_45 = arith.constant 0 : index
    %c0_46 = arith.constant 0 : index
    %82 = vector.load %arg5[%c5, %c0_45, %c0_46] : memref<7x1x4xf32, #tpu.memory_space<vmem>>, vector<1x1x4xf32>
    %83 = vector.shape_cast %82 : vector<1x1x4xf32> to vector<1x4xf32>
    %cst_47 = arith.constant dense<0.000000e+00> : vector<1x4xf32>
    %84 = vector.multi_reduction <add>, %30, %cst_47 [2] : vector<1x4x128xf32> to vector<1x4xf32>
    %85 = arith.addf %83, %84 : vector<1x4xf32>
    %c5_48 = arith.constant 5 : index
    %c0_49 = arith.constant 0 : index
    %c0_50 = arith.constant 0 : index
    %86 = vector.load %arg5[%c5_48, %c0_49, %c0_50] : memref<7x1x4xf32, #tpu.memory_space<vmem>>, vector<1x1x4xf32>
    %87 = vector.shape_cast %86 : vector<1x1x4xf32> to vector<1x4xf32>
    %88 = vector.shape_cast %85 : vector<1x4xf32> to vector<1x1x4xf32>
    tpu.vector_store %arg5[%c5_48, %c0_49, %c0_50], %88 {strides = array<i32>} : memref<7x1x4xf32, #tpu.memory_space<vmem>>, vector<1x1x4xf32>,
    %c6 = arith.constant 6 : index
    %c0_51 = arith.constant 0 : index
    %c0_52 = arith.constant 0 : index
    %89 = vector.load %arg5[%c6, %c0_51, %c0_52] : memref<7x1x4xf32, #tpu.memory_space<vmem>>, vector<1x1x4xf32>
    %90 = vector.shape_cast %89 : vector<1x1x4xf32> to vector<1x4xf32>
    %cst_53 = arith.constant dense<0.000000e+00> : vector<1x4xf32>
    %91 = vector.multi_reduction <add>, %41, %cst_53 [2] : vector<1x4x128xf32> to vector<1x4xf32>
    %92 = arith.addf %90, %91 : vector<1x4xf32>
    %c6_54 = arith.constant 6 : index
    %c0_55 = arith.constant 0 : index
    %c0_56 = arith.constant 0 : index
    %93 = vector.load %arg5[%c6_54, %c0_55, %c0_56] : memref<7x1x4xf32, #tpu.memory_space<vmem>>, vector<1x1x4xf32>
    %94 = vector.shape_cast %93 : vector<1x1x4xf32> to vector<1x4xf32>
    %95 = vector.shape_cast %92 : vector<1x4xf32> to vector<1x1x4xf32>
    tpu.vector_store %arg5[%c6_54, %c0_55, %c0_56], %95 {strides = array<i32>} : memref<7x1x4xf32, #tpu.memory_space<vmem>>, vector<1x1x4xf32>,
    %c1_i32 = arith.constant 1 : i32
    %96 = arith.cmpi eq, %arg1, %c1_i32 : i32
    %97 = arith.extui %96 : i1 to i32
    %c0_i32_57 = arith.constant 0 : i32
    %98 = arith.cmpi ne, %97, %c0_i32_57 : i32
    scf.if %98 {
      %c0_58 = arith.constant 0 : index
      %c0_59 = arith.constant 0 : index
      %c0_60 = arith.constant 0 : index
      %99 = vector.load %arg5[%c0_58, %c0_59, %c0_60] : memref<7x1x4xf32, #tpu.memory_space<vmem>>, vector<7x1x4xf32>
      %c0_61 = arith.constant 0 : index
      %c0_62 = arith.constant 0 : index
      %c0_63 = arith.constant 0 : index
      %c0_64 = arith.constant 0 : index
      %100 = vector.load %arg4[%c0_61, %c0_62, %c0_63, %c0_64] : memref<1x7x1x4xf32, #tpu.memory_space<vmem>>, vector<1x7x1x4xf32>
      %101 = vector.shape_cast %100 : vector<1x7x1x4xf32> to vector<7x1x4xf32>
      %102 = vector.shape_cast %99 : vector<7x1x4xf32> to vector<1x7x1x4xf32>
      tpu.vector_store %arg4[%c0_61, %c0_62, %c0_63, %c0_64], %102 {strides = array<i32>} : memref<1x7x1x4xf32, #tpu.memory_space<vmem>>, vector<1x7x1x4xf32>,
    } else {
    }
    return
  }
  func.func @transform_0(%arg0: i32, %arg1: i32) -> (i32, i32, i32) {
    %c0_i32 = arith.constant 0 : i32
    %c0_i32_0 = arith.constant 0 : i32
    return %arg0, %c0_i32, %arg1 : i32, i32, i32
  }
  func.func @transform_1(%arg0: i32, %arg1: i32) -> (i32, i32, i32) {
    %c0_i32 = arith.constant 0 : i32
    %c0_i32_0 = arith.constant 0 : i32
    return %arg0, %c0_i32, %arg1 : i32, i32, i32
  }
  func.func @transform_2(%arg0: i32, %arg1: i32) -> (i32, i32, i32, i32) {
    %c0_i32 = arith.constant 0 : i32
    %c0_i32_0 = arith.constant 0 : i32
    %c0_i32_1 = arith.constant 0 : i32
    %c0_i32_2 = arith.constant 0 : i32
    return %arg0, %c0_i32, %c0_i32_0, %c0_i32_1 : i32, i32, i32, i32
  }
}

</mosaic_0001>

<llo_original>
// kernel: tpu_custom_call.1
$region0: #{tpu_custom_call.1}
  #allocation0 [shape = 'u32[]', space=smem, size = 0x4, offset = 0x4, fixed_abs, tag = 'smem constant byte address 0x4 - core index']
  #allocation1 [shape = 'u32[144,128]{1,0:T(1,128)}', space=vmem, size = 0x12000, scoped, tag = 'internal scratch']
  #allocation2 [shape = 'f32[7,1,4]{2,1,0:T(1,128)}', space=vmem, size = 0xe00, scoped, tag = 'scratch operand']
  %s0 = inlined_call_operand.hbm [shape: f32[2,4,256], index: 0, kind: input, shape index: {}]
  %s1 = inlined_call_operand.vmem [shape: s8[2,1,256], index: 1, kind: input, shape index: {}]
  %s2 = inlined_call_operand.vmem [shape: f32[2,7,1,4], index: 2, kind: output, shape index: {}]
  %s3 = sld [smem:[#allocation0]]
  $region53: #{tpu_custom_call.1} parent=0
    _
  %s5 = ssub.s32 1, %s3
  %s6 = scalar_select 0, %s5, %s3
  $region1: #{tpu_custom_call.1} parent=0
    #allocation3 [shape = 'u8[4096]{0}', space=vmem, size = 0x1000, scoped, tag = 'input window, operand 0']
    #allocation4 [shape = 's32[2]{0}', space=sflag, size = 0x8, scoped, tag = 'scoped memory for tpu_custom_call.1']
    %7 = vsyncpa [#allocation4], 0
    %s8 = scalar_lea.sflag [#allocation4], 1
    %9 = vsyncpa %s8, 0
    loop: start=0, step=1, limit=6
    $region2: #{tpu_custom_call.1} parent=1 // loop_pre_header
      _
    $region3: #{tpu_custom_call.1} parent=1 // loop_header
      %s11 = sphi 0, %s15
      %p12 = scmp.ge.s32.totalorder %s11, 6
      %s18 = sphi 0, %s30
      %s19 = sphi 0, %s26
      %s20 = sphi 0, %s18
      %s21 = sphi 0, %s19
      %s22 = sphi 0, %s20
      %s23 = sphi 0, %s21
      %s35 = sphi 0, %s37
      %s38 = sphi 0, %s35
      %s39 = sphi 0, %s38
      %s55 = sphi 0, %s39
      %s63 = sphi 0, %s65
      %s66 = sphi 0, %s63
      %s67 = sphi 0, %s66
      %s83 = sphi 0, %s67
      %s89 = sphi 0, %s91
      %s92 = sphi 0, %s89
      %s93 = sphi 0, %s92
      %s109 = sphi 0, %s93
    $region4: #{tpu_custom_call.1} parent=1 // loop_header_branch
      %14 = sbr.rel (%p12) target = $region8
    $region5: #{tpu_custom_call.1} parent=1 // loop_body
      %s16 = ssub.s32 %s11, 1
      %s17 = ssub.s32 %s11, 2
      %s24 = sadd.s32 1, %s19
      %p25 = scmp.ge.s32.totalorder %s24, 2
      %s26 = scalar_select %p25, 0, %s24
      %s27 = sadd.s32 1, %s18
      %s28 = scalar_select %p25, %s27, %s18
      %p29 = scmp.ge.s32.totalorder %s28, 2
      %s30 = scalar_select %p29, 0, %s28
      %s31 = ssub.s32 %s18, %s30
      %s32 = ssub.s32 %s19, %s26
      %s33 = sor.u32 %s31, %s32
      %p34 = scmp.eq.s32.totalorder %s33, 0
      %s36 = sadd.s32 %s35, 1
      %s37 = scalar_select %p34, %s35, %s36
      %p40 = pneg %p34
      %p41 = scmp.eq.s32.totalorder %s11, 3
      %p42 = por %p40, %p41
      %p43 = scmp.ne.s32.totalorder %s35, %s38
      %p44 = scmp.eq.s32.totalorder %s11, 0
      %p45 = por %p43, %p44
      %p46 = scmp.ne.s32.totalorder %s35, %s38
      %p47 = scmp.eq.s32.totalorder %s16, 3
      %p48 = por %p46, %p47
      %p49 = scmp.ne.s32.totalorder %s38, %s39
      %p50 = scmp.eq.s32.totalorder %s16, 0
      %p51 = por %p49, %p50
      %p52 = scmp.ne.s32.totalorder %s38, %s39
      %p53 = scmp.eq.s32.totalorder %s17, 3
      %p54 = por %p52, %p53
      %p56 = scmp.ne.s32.totalorder %s39, %s55
      %p57 = scmp.eq.s32.totalorder %s17, 0
      %p58 = por %p56, %p57
      %s59 = ssub.s32 %s18, %s30
      %s60 = ssub.s32 %s19, %s26
      %s61 = sor.u32 %s59, %s60
      %p62 = scmp.eq.s32.totalorder %s61, 0
      %s64 = sadd.s32 %s63, 1
      %s65 = scalar_select %p62, %s63, %s64
      %p68 = pneg %p62
      %p69 = scmp.eq.s32.totalorder %s11, 3
      %p70 = por %p68, %p69
      %p71 = scmp.ne.s32.totalorder %s63, %s66
      %p72 = scmp.eq.s32.totalorder %s11, 0
      %p73 = por %p71, %p72
      %p74 = scmp.ne.s32.totalorder %s63, %s66
      %p75 = scmp.eq.s32.totalorder %s16, 3
      %p76 = por %p74, %p75
      %p77 = scmp.ne.s32.totalorder %s66, %s67
      %p78 = scmp.eq.s32.totalorder %s16, 0
      %p79 = por %p77, %p78
      %p80 = scmp.ne.s32.totalorder %s66, %s67
      %p81 = scmp.eq.s32.totalorder %s17, 3
      %p82 = por %p80, %p81
      %p84 = scmp.ne.s32.totalorder %s67, %s83
      %p85 = scmp.eq.s32.totalorder %s17, 0
      %p86 = por %p84, %p85
      %s87 = ssub.s32 %s18, %s30
      %p88 = scmp.eq.s32.totalorder %s87, 0
      %s90 = sadd.s32 %s89, 1
      %s91 = scalar_select %p88, %s89, %s90
      %p94 = pneg %p88
      %p95 = scmp.eq.s32.totalorder %s11, 3
      %p96 = por %p94, %p95
      %p97 = scmp.ne.s32.totalorder %s89, %s92
      %p98 = scmp.eq.s32.totalorder %s11, 0
      %p99 = por %p97, %p98
      %p100 = scmp.ne.s32.totalorder %s89, %s92
      %p101 = scmp.eq.s32.totalorder %s16, 3
      %p102 = por %p100, %p101
      %p103 = scmp.ne.s32.totalorder %s92, %s93
      %p104 = scmp.eq.s32.totalorder %s16, 0
      %p105 = por %p103, %p104
      %p106 = scmp.ne.s32.totalorder %s92, %s93
      %p107 = scmp.eq.s32.totalorder %s17, 3
      %p108 = por %p106, %p107
      %p110 = scmp.ne.s32.totalorder %s93, %s109
      %p111 = scmp.eq.s32.totalorder %s17, 0
      %p112 = por %p110, %p111
      %p113 = scmp.le.s32.totalorder 1, %s11
      %p114 = scmp.lt.s32.totalorder %s11, 5
      %p115 = pnand %p113, %p114
      %p116 = pneg %p115
      // Predicated region
      $region9: #{tpu_custom_call.1} parent=5 // pred_check
        _
      $region10: #{tpu_custom_call.1} parent=5 // pred_check_branch
        %118 = sbr.rel (%p115) target = $region12
      $region11: #{tpu_custom_call.1} parent=5 // pred_region
        %s119 = ssub.s32 %s11, 1
      $region12: #{tpu_custom_call.1} parent=5 // pred_fallthru
        _
      %p120 = scmp.lt.s32.totalorder %s11, 4
      // Predicated region
      $region13: #{tpu_custom_call.1} parent=5 // pred_check
        %p121 = pneg %p120
      $region14: #{tpu_custom_call.1} parent=5 // pred_check_branch
        %123 = sbr.rel (%p121) target = $region16
      $region15: #{tpu_custom_call.1} parent=5 // pred_region
        // Predicated region
        $region17: #{tpu_custom_call.1} parent=15 // pred_check
          %p124 = pneg %p45
        $region18: #{tpu_custom_call.1} parent=15 // pred_check_branch
          %126 = sbr.rel (%p124) target = $region20
        $region19: #{tpu_custom_call.1} parent=15 // pred_region
          %s127 = sand.u32 %s35, 1
          %s128 = scalar_lea.sflag [#allocation4], %s127
          %s129 = sand.u32 %s35, 1
          %s130 = smul.addr %s129, 4
          %s131 = scalar_lea.vmem [#allocation3], %s130
          %s133 = ssub.s32 64, 64
          %134 = vsyncadd %s128, %s133
          %s135 = smul.addr %s18, 2
          %s136 = sadd.s32 %s19, %s135
          %s137 = smul.addr %s136, 64
          %s138 = scalar_lea.hbm %s0, %s137
          %s140 = sshll.u32 %s131, 4
          %s141 = int_to_ptr.vmem [resolvable:$true] %s140
          %143 = dma.hbm_to_vmem [thread:$0]  %s138, 64, %s141, %s128
        $region20: #{tpu_custom_call.1} parent=15 // pred_fallthru
          _
        // Predicated region
        $region21: #{tpu_custom_call.1} parent=15 // pred_check
          %p144 = pneg %p73
        $region22: #{tpu_custom_call.1} parent=15 // pred_check_branch
          %146 = sbr.rel (%p144) target = $region24
        $region23: #{tpu_custom_call.1} parent=15 // pred_region
          %p147 = scmp.lt.s32.totalorder %s18, 1
          %s148 = scalar_select %p147, %s18, 1
          %p149 = scmp.lt.s32.totalorder %s19, 1
          %s150 = scalar_select %p149, %s19, 1
          %s151 = smul.addr %s148, 2
          %s152 = sadd.s32 %s150, %s151
          %s153 = scalar_lea.vmem %s1, %s152
        $region24: #{tpu_custom_call.1} parent=15 // pred_fallthru
          _
      $region16: #{tpu_custom_call.1} parent=5 // pred_fallthru
        _
      %p154 = scmp.le.s32.totalorder 1, %s11
      %p155 = scmp.lt.s32.totalorder %s11, 5
      %p156 = pnand %p154, %p155
      %p157 = pneg %p156
      // Predicated region
      $region25: #{tpu_custom_call.1} parent=5 // pred_check
        _
      $region26: #{tpu_custom_call.1} parent=5 // pred_check_branch
        %159 = sbr.rel (%p156) target = $region28
      $region27: #{tpu_custom_call.1} parent=5 // pred_region
        %s160 = ssub.s32 %s11, 1
        %s161 = sand.u32 %s38, 1
        %s162 = scalar_lea.sflag [#allocation4], %s161
        %s163 = sand.u32 %s38, 1
        %s164 = smul.addr %s163, 4
        %s165 = scalar_lea.vmem [#allocation3], %s164
        // Predicated region
        $region29: #{tpu_custom_call.1} parent=27 // pred_check
          %p166 = pneg %p51
        $region30: #{tpu_custom_call.1} parent=27 // pred_check_branch
          %168 = sbr.rel (%p166) target = $region32
        $region31: #{tpu_custom_call.1} parent=27 // pred_region
          %169 = dma.done %s162, 64
        $region32: #{tpu_custom_call.1} parent=27 // pred_fallthru
          _
        %s170 = sand.u32 %s38, 1
        %s171 = scalar_lea.sflag [#allocation4], %s170
        %s172 = sand.u32 %s38, 1
        %s173 = smul.addr %s172, 4
        %s174 = scalar_lea.vmem [#allocation3], %s173
        %p175 = pneg %p51
        %p176 = pneg %p48
        %p177 = scmp.lt.s32.totalorder %s20, 1
        %s178 = scalar_select %p177, %s20, 1
        %p179 = scmp.lt.s32.totalorder %s21, 1
        %s180 = scalar_select %p179, %s21, 1
        %s181 = smul.addr %s178, 2
        %s182 = sadd.s32 %s180, %s181
        %s183 = scalar_lea.vmem %s1, %s182
        %p184 = pneg %p79
        %p185 = pneg %p76
        %p186 = pneg %p105
        %p187 = pneg %p102
        %p188 = scmp.lt.s32.totalorder %s20, 1
        %s189 = scalar_select %p188, %s20, 1
        %s190 = smul.addr %s189, 7
        %s191 = scalar_lea.vmem %s2, %s190
        %p192 = scmp.lt.s32.totalorder %s20, 1
        %s193 = scalar_select %p192, %s20, 1
        %p194 = scmp.lt.s32.totalorder %s21, 1
        %s195 = scalar_select %p194, %s21, 1
        %s196 = smul.addr %s193, 2
        %s197 = sadd.s32 %s195, %s196
        %s198 = scalar_lea.vmem %s1, %s197
        %p199 = scmp.lt.s32.totalorder %s20, 1
        %s200 = scalar_select %p199, %s20, 1
        %s201 = smul.addr %s200, 7
        %s202 = scalar_lea.vmem %s2, %s201
        %p203 = scmp.eq.s32.totalorder %s21, 0
        // Predicated region
        $region33: #{tpu_custom_call.1} parent=27 // pred_check
          %p204 = pneg %p203
        $region34: #{tpu_custom_call.1} parent=27 // pred_check_branch
          %206 = sbr.rel (%p204) target = $region36
        $region35: #{tpu_custom_call.1} parent=27 // pred_region
          %vm207 = vcmask 24576
          %208 = vst.msk [vmem:[#allocation2] sm:$0x1] %vm207, 0.0
          %209 = vst.msk [vmem:[#allocation2 + $0x1] sm:$0x1] %vm207, 0.0
          %210 = vst.msk [vmem:[#allocation2 + $0x2] sm:$0x1] %vm207, 0.0
          %211 = vst.msk [vmem:[#allocation2 + $0x3] sm:$0x1] %vm207, 0.0
          %212 = vst.msk [vmem:[#allocation2 + $0x4] sm:$0x1] %vm207, 0.0
          %213 = vst.msk [vmem:[#allocation2 + $0x5] sm:$0x1] %vm207, 0.0
          %214 = vst.msk [vmem:[#allocation2 + $0x6] sm:$0x1] %vm207, 0.0
        $region36: #{tpu_custom_call.1} parent=27 // pred_fallthru
          _
        %v215 = vld [vmem:[%s165] sm:$0xf]
        %v216 = vld [vmem:[%s198] sm:$0x1]
        %v217 = vunpack.c.0.s8 %v216
        %v218 = vlaneseq
        %v219 = vshrl.u32 %v218, 7
        %v220 = vlaneseq
        %v221 = vshrl.u32 %v220, 7
        %v222 = vsub.s32 0, %v221
        %v223 = vrot.slane %v217, %v222
        %vm224 = vcmp.eq.s32.totalorder %v223, %v219
        %v225 = vsel %vm224, 1, 0
        %v226 = vcvt.s32.f32 %v225
        %vm227 = vcmask 1043456
        %v228 = vsel %vm227, %v215, -inf
        %v229 = vrot.slane %v228, 4
        %v230 = vmax.f32 %v228, %v229
        %v231 = vrot.slane %v230, 2
        %v232 = vmax.f32 %v230, %v231
        %v233 = vrot.slane %v232, 1
        %v234 = vmax.f32 %v232, %v233
        %v235 = vsub.f32 %v215, %v234
        %v236 = vmul.f32 %v235, 1.442695
        %v237 = vpow.pop %v236
        %v238 = vsel %vm227, %v237, 0.0
        %v239 = vrot.slane %v238, 4
        %v240 = vadd.f32 %v238, %v239
        %v241 = vrot.slane %v240, 2
        %v242 = vadd.f32 %v240, %v241
        %v243 = vrot.slane %v242, 1
        %v244 = vadd.f32 %v242, %v243
        %v245 = vrcp.pop %v244
        %v246 = vmul.f32 %v237, %v245
        %v247 = vlog2.pop %v244
        %v248 = vmul.f32 %v247, 0.6931472
        %v249 = vsub.f32 %v235, %v248
        %v250 = vmul.f32 %v215, 0.5
        %v251 = vtanh.pop %v250
        %v252 = vadd.f32 %v251, 1.0
        %v253 = vmul.f32 %v252, 0.5
        %v254 = vsub.f32 %v253, %v226
        %v255 = vand.u32 2147483647, %v254
        %v256 = vmul.f32 %v255, -2.0
        %v257 = vmul.f32 %v256, 1.442695
        %v258 = vpow.pop %v257
        %v259 = vadd.f32 %v258, 1.0
        %v260 = vlog2.pop %v259
        %v261 = vmul.f32 %v260, 0.6931472
        %v262 = vadd.f32 %v255, %v261
        %v263 = vsub.f32 %v262, 0.6931472
        %v264 = vld [vmem:[#allocation2] sm:$0x1]
        %v265 = vsel %vm227, %v226, 0.0
        %266 = vadd.xlane.f32.xlu0 %v265
        %v267 = vpop.xlane.xlu0 %266
        %v269 = vlaneseq
        %v270 = vshrl.u32 %v269, 7
        %v271 = vsub.s32 0, %v270
        %v272 = vrot.slane %v267, %v271
        %v273 = vlaneseq
        %v274 = vshrl.u32 %v273, 7
        %v275 = vsub.s32 1, %v274
        %v276 = vrot.slane %v267, %v275
        %v277 = vlaneseq
        %v278 = vshrl.u32 %v277, 7
        %v279 = vsub.s32 2, %v278
        %v280 = vrot.slane %v267, %v279
        %v281 = vlaneseq
        %v282 = vshrl.u32 %v281, 7
        %v283 = vsub.s32 3, %v282
        %v284 = vrot.slane %v267, %v283
        %v285 = vcombine.low %v272, %v276
        %v286 = vcombine.low %v280, %v284
        %v288 = vunpack.c.l.s4 1966171168
        %v289 = vunpack.c.0.s8 %v288
        %v290 = vlaneseq
        %v291 = vshrl.u32 %v290, 7
        %v292 = vsub.s32 %v289, %v291
        %v293 = vrot.slane %v285, %v292
        %v295 = vunpack.c.l.s4 1966171168
        %v296 = vunpack.c.0.s8 %v295
        %v297 = vlaneseq
        %v298 = vshrl.u32 %v297, 7
        %v299 = vsub.s32 %v296, %v298
        %v300 = vrot.slane %v286, %v299
        %v301 = vcombine.low %v293, %v300
        %v303 = vunpack.c.l.s4 1966171168
        %v304 = vunpack.c.0.s8 %v303
        %v305 = vlaneseq
        %v306 = vshrl.u32 %v305, 7
        %v307 = vsub.s32 %v304, %v306
        %v308 = vrot.slane %v301, %v307
        %309 = vset.pattern.permute.xlu0 0
        %310 = vperm.xlu0 %309, %v308
        %v311 = vpop.permute.xlu0 %310
        %v312 = vlaneseq
        %v313 = vand.u32 %v312, 127
        %v314 = vlaneseq
        %v315 = vshrl.u32 %v314, 7
        %v316 = vsub.s32 %v313, %v315
        %v317 = vrot.slane %v311, %v316
        %v319 = vunpack.c.l.s4 1966171168
        %v320 = vunpack.c.0.s8 %v319
        %v321 = vlaneseq
        %v322 = vshrl.u32 %v321, 7
        %v323 = vsub.s32 %v320, %v322
        %v324 = vrot.slane %v317, %v323
        %v326 = vunpack.c.l.s4 1966171168
        %v327 = vunpack.c.0.s8 %v326
        %v328 = vlaneseq
        %v329 = vshrl.u32 %v328, 7
        %v330 = vsub.s32 %v327, %v329
        %v331 = vrot.slane %v324, %v330
        %v333 = vadd.f32 %v264, %v331
        %vm334 = vcmask 24576
        %335 = vst.msk [vmem:[#allocation2] sm:$0x1] %vm334, %v333
        %s336 = scalar_lea.vmem [#allocation2], 1
        %v337 = vld [vmem:[%s336] sm:$0x1]
        %v338 = vsub.f32 0.0, %v249
        %v339 = vmul.f32 %v226, %v338
        %v340 = vsel %vm227, %v339, 0.0
        %341 = vadd.xlane.f32.xlu0 %v340
        %v342 = vpop.xlane.xlu0 %341
        %v344 = vlaneseq
        %v345 = vshrl.u32 %v344, 7
        %v346 = vsub.s32 0, %v345
        %v347 = vrot.slane %v342, %v346
        %v348 = vlaneseq
        %v349 = vshrl.u32 %v348, 7
        %v350 = vsub.s32 1, %v349
        %v351 = vrot.slane %v342, %v350
        %v352 = vlaneseq
        %v353 = vshrl.u32 %v352, 7
        %v354 = vsub.s32 2, %v353
        %v355 = vrot.slane %v342, %v354
        %v356 = vlaneseq
        %v357 = vshrl.u32 %v356, 7
        %v358 = vsub.s32 3, %v357
        %v359 = vrot.slane %v342, %v358
        %v360 = vcombine.low %v347, %v351
        %v361 = vcombine.low %v355, %v359
        %v363 = vunpack.c.l.s4 1966171168
        %v364 = vunpack.c.0.s8 %v363
        %v365 = vlaneseq
        %v366 = vshrl.u32 %v365, 7
        %v367 = vsub.s32 %v364, %v366
        %v368 = vrot.slane %v360, %v367
        %v370 = vunpack.c.l.s4 1966171168
        %v371 = vunpack.c.0.s8 %v370
        %v372 = vlaneseq
        %v373 = vshrl.u32 %v372, 7
        %v374 = vsub.s32 %v371, %v373
        %v375 = vrot.slane %v361, %v374
        %v376 = vcombine.low %v368, %v375
        %v378 = vunpack.c.l.s4 1966171168
        %v379 = vunpack.c.0.s8 %v378
        %v380 = vlaneseq
        %v381 = vshrl.u32 %v380, 7
        %v382 = vsub.s32 %v379, %v381
        %v383 = vrot.slane %v376, %v382
        %384 = vset.pattern.permute.xlu0 0
        %385 = vperm.xlu0 %384, %v383
        %v386 = vpop.permute.xlu0 %385
        %v387 = vlaneseq
        %v388 = vshrl.u32 %v387, 7
        %v389 = vsub.s32 %v313, %v388
        %v390 = vrot.slane %v386, %v389
        %v392 = vunpack.c.l.s4 1966171168
        %v393 = vunpack.c.0.s8 %v392
        %v394 = vlaneseq
        %v395 = vshrl.u32 %v394, 7
        %v396 = vsub.s32 %v393, %v395
        %v397 = vrot.slane %v390, %v396
        %v399 = vunpack.c.l.s4 1966171168
        %v400 = vunpack.c.0.s8 %v399
        %v401 = vlaneseq
        %v402 = vshrl.u32 %v401, 7
        %v403 = vsub.s32 %v400, %v402
        %v404 = vrot.slane %v397, %v403
        %v406 = vadd.f32 %v337, %v404
        %407 = vst.msk [vmem:[%s336] sm:$0x1] %vm334, %v406
        %s408 = scalar_lea.vmem [#allocation2], 2
        %v409 = vld [vmem:[%s408] sm:$0x1]
        %v410 = vmul.f32 %v246, %v226
        %v411 = vsel %vm227, %v410, 0.0
        %412 = vadd.xlane.f32.xlu0 %v411
        %v413 = vpop.xlane.xlu0 %412
        %v415 = vlaneseq
        %v416 = vshrl.u32 %v415, 7
        %v417 = vsub.s32 0, %v416
        %v418 = vrot.slane %v413, %v417
        %v419 = vlaneseq
        %v420 = vshrl.u32 %v419, 7
        %v421 = vsub.s32 1, %v420
        %v422 = vrot.slane %v413, %v421
        %v423 = vlaneseq
        %v424 = vshrl.u32 %v423, 7
        %v425 = vsub.s32 2, %v424
        %v426 = vrot.slane %v413, %v425
        %v427 = vlaneseq
        %v428 = vshrl.u32 %v427, 7
        %v429 = vsub.s32 3, %v428
        %v430 = vrot.slane %v413, %v429
        %v431 = vcombine.low %v418, %v422
        %v432 = vcombine.low %v426, %v430
        %v434 = vunpack.c.l.s4 1966171168
        %v435 = vunpack.c.0.s8 %v434
        %v436 = vlaneseq
        %v437 = vshrl.u32 %v436, 7
        %v438 = vsub.s32 %v435, %v437
        %v439 = vrot.slane %v431, %v438
        %v441 = vunpack.c.l.s4 1966171168
        %v442 = vunpack.c.0.s8 %v441
        %v443 = vlaneseq
        %v444 = vshrl.u32 %v443, 7
        %v445 = vsub.s32 %v442, %v444
        %v446 = vrot.slane %v432, %v445
        %v447 = vcombine.low %v439, %v446
        %v449 = vunpack.c.l.s4 1966171168
        %v450 = vunpack.c.0.s8 %v449
        %v451 = vlaneseq
        %v452 = vshrl.u32 %v451, 7
        %v453 = vsub.s32 %v450, %v452
        %v454 = vrot.slane %v447, %v453
        %455 = vset.pattern.permute.xlu0 0
        %456 = vperm.xlu0 %455, %v454
        %v457 = vpop.permute.xlu0 %456
        %v458 = vlaneseq
        %v459 = vshrl.u32 %v458, 7
        %v460 = vsub.s32 %v313, %v459
        %v461 = vrot.slane %v457, %v460
        %v463 = vunpack.c.l.s4 1966171168
        %v464 = vunpack.c.0.s8 %v463
        %v465 = vlaneseq
        %v466 = vshrl.u32 %v465, 7
        %v467 = vsub.s32 %v464, %v466
        %v468 = vrot.slane %v461, %v467
        %v470 = vunpack.c.l.s4 1966171168
        %v471 = vunpack.c.0.s8 %v470
        %v472 = vlaneseq
        %v473 = vshrl.u32 %v472, 7
        %v474 = vsub.s32 %v471, %v473
        %v475 = vrot.slane %v468, %v474
        %v477 = vadd.f32 %v409, %v475
        %478 = vst.msk [vmem:[%s408] sm:$0x1] %vm334, %v477
        %s479 = scalar_lea.vmem [#allocation2], 3
        %v480 = vld [vmem:[%s479] sm:$0x1]
        %v481 = vsel %vm227, %v246, 0.0
        %482 = vadd.xlane.f32.xlu0 %v481
        %v483 = vpop.xlane.xlu0 %482
        %v485 = vlaneseq
        %v486 = vshrl.u32 %v485, 7
        %v487 = vsub.s32 0, %v486
        %v488 = vrot.slane %v483, %v487
        %v489 = vlaneseq
        %v490 = vshrl.u32 %v489, 7
        %v491 = vsub.s32 1, %v490
        %v492 = vrot.slane %v483, %v491
        %v493 = vlaneseq
        %v494 = vshrl.u32 %v493, 7
        %v495 = vsub.s32 2, %v494
        %v496 = vrot.slane %v483, %v495
        %v497 = vlaneseq
        %v498 = vshrl.u32 %v497, 7
        %v499 = vsub.s32 3, %v498
        %v500 = vrot.slane %v483, %v499
        %v501 = vcombine.low %v488, %v492
        %v502 = vcombine.low %v496, %v500
        %v504 = vunpack.c.l.s4 1966171168
        %v505 = vunpack.c.0.s8 %v504
        %v506 = vlaneseq
        %v507 = vshrl.u32 %v506, 7
        %v508 = vsub.s32 %v505, %v507
        %v509 = vrot.slane %v501, %v508
        %v511 = vunpack.c.l.s4 1966171168
        %v512 = vunpack.c.0.s8 %v511
        %v513 = vlaneseq
        %v514 = vshrl.u32 %v513, 7
        %v515 = vsub.s32 %v512, %v514
        %v516 = vrot.slane %v502, %v515
        %v517 = vcombine.low %v509, %v516
        %v519 = vunpack.c.l.s4 1966171168
        %v520 = vunpack.c.0.s8 %v519
        %v521 = vlaneseq
        %v522 = vshrl.u32 %v521, 7
        %v523 = vsub.s32 %v520, %v522
        %v524 = vrot.slane %v517, %v523
        %525 = vset.pattern.permute.xlu0 0
        %526 = vperm.xlu0 %525, %v524
        %v527 = vpop.permute.xlu0 %526
        %v528 = vlaneseq
        %v529 = vshrl.u32 %v528, 7
        %v530 = vsub.s32 %v313, %v529
        %v531 = vrot.slane %v527, %v530
        %v533 = vunpack.c.l.s4 1966171168
        %v534 = vunpack.c.0.s8 %v533
        %v535 = vlaneseq
        %v536 = vshrl.u32 %v535, 7
        %v537 = vsub.s32 %v534, %v536
        %v538 = vrot.slane %v531, %v537
        %v540 = vunpack.c.l.s4 1966171168
        %v541 = vunpack.c.0.s8 %v540
        %v542 = vlaneseq
        %v543 = vshrl.u32 %v542, 7
        %v544 = vsub.s32 %v541, %v543
        %v545 = vrot.slane %v538, %v544
        %v547 = vadd.f32 %v480, %v545
        %548 = vst.msk [vmem:[%s479] sm:$0x1] %vm334, %v547
        %s549 = scalar_lea.vmem [#allocation2], 4
        %v550 = vld [vmem:[%s549] sm:$0x1]
        %v551 = vmul.f32 %v253, %v226
        %v552 = vsel %vm227, %v551, 0.0
        %553 = vadd.xlane.f32.xlu0 %v552
        %v554 = vpop.xlane.xlu0 %553
        %v556 = vlaneseq
        %v557 = vshrl.u32 %v556, 7
        %v558 = vsub.s32 0, %v557
        %v559 = vrot.slane %v554, %v558
        %v560 = vlaneseq
        %v561 = vshrl.u32 %v560, 7
        %v562 = vsub.s32 1, %v561
        %v563 = vrot.slane %v554, %v562
        %v564 = vlaneseq
        %v565 = vshrl.u32 %v564, 7
        %v566 = vsub.s32 2, %v565
        %v567 = vrot.slane %v554, %v566
        %v568 = vlaneseq
        %v569 = vshrl.u32 %v568, 7
        %v570 = vsub.s32 3, %v569
        %v571 = vrot.slane %v554, %v570
        %v572 = vcombine.low %v559, %v563
        %v573 = vcombine.low %v567, %v571
        %v575 = vunpack.c.l.s4 1966171168
        %v576 = vunpack.c.0.s8 %v575
        %v577 = vlaneseq
        %v578 = vshrl.u32 %v577, 7
        %v579 = vsub.s32 %v576, %v578
        %v580 = vrot.slane %v572, %v579
        %v582 = vunpack.c.l.s4 1966171168
        %v583 = vunpack.c.0.s8 %v582
        %v584 = vlaneseq
        %v585 = vshrl.u32 %v584, 7
        %v586 = vsub.s32 %v583, %v585
        %v587 = vrot.slane %v573, %v586
        %v588 = vcombine.low %v580, %v587
        %v590 = vunpack.c.l.s4 1966171168
        %v591 = vunpack.c.0.s8 %v590
        %v592 = vlaneseq
        %v593 = vshrl.u32 %v592, 7
        %v594 = vsub.s32 %v591, %v593
        %v595 = vrot.slane %v588, %v594
        %596 = vset.pattern.permute.xlu0 0
        %597 = vperm.xlu0 %596, %v595
        %v598 = vpop.permute.xlu0 %597
        %v599 = vlaneseq
        %v600 = vshrl.u32 %v599, 7
        %v601 = vsub.s32 %v313, %v600
        %v602 = vrot.slane %v598, %v601
        %v604 = vunpack.c.l.s4 1966171168
        %v605 = vunpack.c.0.s8 %v604
        %v606 = vlaneseq
        %v607 = vshrl.u32 %v606, 7
        %v608 = vsub.s32 %v605, %v607
        %v609 = vrot.slane %v602, %v608
        %v611 = vunpack.c.l.s4 1966171168
        %v612 = vunpack.c.0.s8 %v611
        %v613 = vlaneseq
        %v614 = vshrl.u32 %v613, 7
        %v615 = vsub.s32 %v612, %v614
        %v616 = vrot.slane %v609, %v615
        %v618 = vadd.f32 %v550, %v616
        %619 = vst.msk [vmem:[%s549] sm:$0x1] %vm334, %v618
        %s620 = scalar_lea.vmem [#allocation2], 5
        %v621 = vld [vmem:[%s620] sm:$0x1]
        %v622 = vsel %vm227, %v253, 0.0
        %623 = vadd.xlane.f32.xlu0 %v622
        %v624 = vpop.xlane.xlu0 %623
        %v626 = vlaneseq
        %v627 = vshrl.u32 %v626, 7
        %v628 = vsub.s32 0, %v627
        %v629 = vrot.slane %v624, %v628
        %v630 = vlaneseq
        %v631 = vshrl.u32 %v630, 7
        %v632 = vsub.s32 1, %v631
        %v633 = vrot.slane %v624, %v632
        %v634 = vlaneseq
        %v635 = vshrl.u32 %v634, 7
        %v636 = vsub.s32 2, %v635
        %v637 = vrot.slane %v624, %v636
        %v638 = vlaneseq
        %v639 = vshrl.u32 %v638, 7
        %v640 = vsub.s32 3, %v639
        %v641 = vrot.slane %v624, %v640
        %v642 = vcombine.low %v629, %v633
        %v643 = vcombine.low %v637, %v641
        %v645 = vunpack.c.l.s4 1966171168
        %v646 = vunpack.c.0.s8 %v645
        %v647 = vlaneseq
        %v648 = vshrl.u32 %v647, 7
        %v649 = vsub.s32 %v646, %v648
        %v650 = vrot.slane %v642, %v649
        %v652 = vunpack.c.l.s4 1966171168
        %v653 = vunpack.c.0.s8 %v652
        %v654 = vlaneseq
        %v655 = vshrl.u32 %v654, 7
        %v656 = vsub.s32 %v653, %v655
        %v657 = vrot.slane %v643, %v656
        %v658 = vcombine.low %v650, %v657
        %v660 = vunpack.c.l.s4 1966171168
        %v661 = vunpack.c.0.s8 %v660
        %v662 = vlaneseq
        %v663 = vshrl.u32 %v662, 7
        %v664 = vsub.s32 %v661, %v663
        %v665 = vrot.slane %v658, %v664
        %666 = vset.pattern.permute.xlu0 0
        %667 = vperm.xlu0 %666, %v665
        %v668 = vpop.permute.xlu0 %667
        %v669 = vlaneseq
        %v670 = vshrl.u32 %v669, 7
        %v671 = vsub.s32 %v313, %v670
        %v672 = vrot.slane %v668, %v671
        %v674 = vunpack.c.l.s4 1966171168
        %v675 = vunpack.c.0.s8 %v674
        %v676 = vlaneseq
        %v677 = vshrl.u32 %v676, 7
        %v678 = vsub.s32 %v675, %v677
        %v679 = vrot.slane %v672, %v678
        %v681 = vunpack.c.l.s4 1966171168
        %v682 = vunpack.c.0.s8 %v681
        %v683 = vlaneseq
        %v684 = vshrl.u32 %v683, 7
        %v685 = vsub.s32 %v682, %v684
        %v686 = vrot.slane %v679, %v685
        %v688 = vadd.f32 %v621, %v686
        %689 = vst.msk [vmem:[%s620] sm:$0x1] %vm334, %v688
        %s690 = scalar_lea.vmem [#allocation2], 6
        %v691 = vld [vmem:[%s690] sm:$0x1]
        %v692 = vsel %vm227, %v263, 0.0
        %693 = vadd.xlane.f32.xlu0 %v692
        %v694 = vpop.xlane.xlu0 %693
        %v696 = vlaneseq
        %v697 = vshrl.u32 %v696, 7
        %v698 = vsub.s32 0, %v697
        %v699 = vrot.slane %v694, %v698
        %v700 = vlaneseq
        %v701 = vshrl.u32 %v700, 7
        %v702 = vsub.s32 1, %v701
        %v703 = vrot.slane %v694, %v702
        %v704 = vlaneseq
        %v705 = vshrl.u32 %v704, 7
        %v706 = vsub.s32 2, %v705
        %v707 = vrot.slane %v694, %v706
        %v708 = vlaneseq
        %v709 = vshrl.u32 %v708, 7
        %v710 = vsub.s32 3, %v709
        %v711 = vrot.slane %v694, %v710
        %v712 = vcombine.low %v699, %v703
        %v713 = vcombine.low %v707, %v711
        %v715 = vunpack.c.l.s4 1966171168
        %v716 = vunpack.c.0.s8 %v715
        %v717 = vlaneseq
        %v718 = vshrl.u32 %v717, 7
        %v719 = vsub.s32 %v716, %v718
        %v720 = vrot.slane %v712, %v719
        %v722 = vunpack.c.l.s4 1966171168
        %v723 = vunpack.c.0.s8 %v722
        %v724 = vlaneseq
        %v725 = vshrl.u32 %v724, 7
        %v726 = vsub.s32 %v723, %v725
        %v727 = vrot.slane %v713, %v726
        %v728 = vcombine.low %v720, %v727
        %v730 = vunpack.c.l.s4 1966171168
        %v731 = vunpack.c.0.s8 %v730
        %v732 = vlaneseq
        %v733 = vshrl.u32 %v732, 7
        %v734 = vsub.s32 %v731, %v733
        %v735 = vrot.slane %v728, %v734
        %736 = vset.pattern.permute.xlu0 0
        %737 = vperm.xlu0 %736, %v735
        %v738 = vpop.permute.xlu0 %737
        %v739 = vlaneseq
        %v740 = vshrl.u32 %v739, 7
        %v741 = vsub.s32 %v313, %v740
        %v742 = vrot.slane %v738, %v741
        %v744 = vunpack.c.l.s4 1966171168
        %v745 = vunpack.c.0.s8 %v744
        %v746 = vlaneseq
        %v747 = vshrl.u32 %v746, 7
        %v748 = vsub.s32 %v745, %v747
        %v749 = vrot.slane %v742, %v748
        %v751 = vunpack.c.l.s4 1966171168
        %v752 = vunpack.c.0.s8 %v751
        %v753 = vlaneseq
        %v754 = vshrl.u32 %v753, 7
        %v755 = vsub.s32 %v752, %v754
        %v756 = vrot.slane %v749, %v755
        %v758 = vadd.f32 %v691, %v756
        %759 = vst.msk [vmem:[%s690] sm:$0x1] %vm334, %v758
        %p760 = scmp.eq.s32.totalorder %s21, 1
        // Predicated region
        $region37: #{tpu_custom_call.1} parent=27 // pred_check
          %p761 = pneg %p760
        $region38: #{tpu_custom_call.1} parent=27 // pred_check_branch
          %763 = sbr.rel (%p761) target = $region40
        $region39: #{tpu_custom_call.1} parent=27 // pred_region
          %v764 = vld [vmem:[#allocation2] sm:$0x1]
          %v765 = vld [vmem:[#allocation2 + $0x1] sm:$0x1]
          %v766 = vld [vmem:[#allocation2 + $0x2] sm:$0x1]
          %v767 = vld [vmem:[#allocation2 + $0x3] sm:$0x1]
          %v768 = vld [vmem:[#allocation2 + $0x4] sm:$0x1]
          %v769 = vld [vmem:[#allocation2 + $0x5] sm:$0x1]
          %v770 = vld [vmem:[#allocation2 + $0x6] sm:$0x1]
          %771 = vst.msk [vmem:[%s202] sm:$0x1] %vm334, %v764
          %772 = vst.msk [vmem:[%s202 + $0x1] sm:$0x1] %vm334, %v765
          %773 = vst.msk [vmem:[%s202 + $0x2] sm:$0x1] %vm334, %v766
          %774 = vst.msk [vmem:[%s202 + $0x3] sm:$0x1] %vm334, %v767
          %775 = vst.msk [vmem:[%s202 + $0x4] sm:$0x1] %vm334, %v768
          %776 = vst.msk [vmem:[%s202 + $0x5] sm:$0x1] %vm334, %v769
          %777 = vst.msk [vmem:[%s202 + $0x6] sm:$0x1] %vm334, %v770
        $region40: #{tpu_custom_call.1} parent=27 // pred_fallthru
          _
        %p778 = scmp.lt.s32.totalorder %s20, 1
        %s779 = scalar_select %p778, %s20, 1
        %s780 = smul.addr %s779, 7
        %s781 = scalar_lea.vmem %s2, %s780
        // Predicated region
        $region41: #{tpu_custom_call.1} parent=27 // pred_check
          %p782 = pneg %p102
        $region42: #{tpu_custom_call.1} parent=27 // pred_check_branch
          %784 = sbr.rel (%p782) target = $region44
        $region43: #{tpu_custom_call.1} parent=27 // pred_region
          _
        $region44: #{tpu_custom_call.1} parent=27 // pred_fallthru
          _
      $region28: #{tpu_custom_call.1} parent=5 // pred_fallthru
        _
      %p785 = scmp.le.s32.totalorder 2, %s11
      // Predicated region
      $region45: #{tpu_custom_call.1} parent=5 // pred_check
        %p786 = pneg %p785
      $region46: #{tpu_custom_call.1} parent=5 // pred_check_branch
        %788 = sbr.rel (%p786) target = $region48
      $region47: #{tpu_custom_call.1} parent=5 // pred_region
        %s789 = ssub.s32 %s11, 2
        // Predicated region
        $region49: #{tpu_custom_call.1} parent=47 // pred_check
          %p790 = pneg %p108
        $region50: #{tpu_custom_call.1} parent=47 // pred_check_branch
          %792 = sbr.rel (%p790) target = $region52
        $region51: #{tpu_custom_call.1} parent=47 // pred_region
          %p793 = scmp.lt.s32.totalorder %s22, 1
          %s794 = scalar_select %p793, %s22, 1
          %s795 = smul.addr %s794, 7
          %s796 = scalar_lea.vmem %s2, %s795
        $region52: #{tpu_custom_call.1} parent=47 // pred_fallthru
          _
      $region48: #{tpu_custom_call.1} parent=5 // pred_fallthru
        _
    $region6: #{tpu_custom_call.1} parent=1 // loop_footer
      %s15 = sadd.s32 1, %s11
    $region7: #{tpu_custom_call.1} parent=1 // loop_footer_branch
      %10 = sbr.rel target = $region3
    $region8: #{tpu_custom_call.1} parent=1 // loop_exit
      _
    %797 = vsyncpa [#allocation4], 1
    %s798 = scalar_lea.sflag [#allocation4], 1
    %799 = vsyncpa %s798, 1

</llo_original>
